<compile_context>
chip_gen: v7x
topology: tpu7x:2x2x1
jax: 0.10.0
libtpu: 0.0.40
codegen_flags: <defaults>
</compile_context>

<pallas_src>
import math
import functools

import numpy as np
import jax
import jax.numpy as jnp
from jax import lax
from jax.experimental import pallas as pl
from jax.experimental.pallas import tpu as pltpu


def _is_f32(dt):
    return np.dtype(dt) == np.dtype(np.float32)


def _pick_tile(dim, cap, mult):
    """Largest t <= cap that divides dim and is a multiple of `mult`; `dim`
    itself if dim <= cap; else `cap` (trailing partial blocks are masked)."""
    if dim <= cap:
        return dim
    t = cap - (cap % mult)
    while t >= mult:
        if dim % t == 0:
            return t
        t -= mult
    return cap


def _pick_reduce_tile(dim, cap, mult=128):
    """K-tile must divide Din exactly (padding would pollute the accumulator)."""
    if dim <= cap:
        return dim
    t = cap - (cap % mult)
    while t >= mult:
        if dim % t == 0:
            return t
        t -= mult
    # TODO(synk): mask the K remainder instead of a single full-K step.
    return dim


def _choose_tq(sq, cap=128):
    """Query-row tile: a multiple-of-8 divisor of Sq (<= cap), else Sq."""
    if sq <= cap:
        return sq
    t = cap - (cap % 8)
    while t >= 8:
        if sq % t == 0:
            return t
        t -= 8
    return sq


# -----------------------------------------------------------------------------
# Kernel 1: tiled dense layer   y = x @ w_t + b
#   x: (M, Din), w_t: (Din, Dout) pre-transposed, b: (Dout,)  ->  (M, Dout)
# Grid = (M tiles, N tiles, K tiles); K innermost ("arbitrary"); output block
# is resident across K.
# -----------------------------------------------------------------------------
def _linear_acc_kernel(x_ref, w_ref, b_ref, o_ref, acc_ref, *, compute_dtype):
    k = pl.program_id(2)

    @pl.when(k == 0)
    def _init():
        acc_ref[...] = jnp.zeros_like(acc_ref)

    acc_ref[...] += jnp.dot(
        x_ref[...].astype(compute_dtype),
        w_ref[...].astype(compute_dtype),
        preferred_element_type=jnp.float32,
    )

    @pl.when(k == pl.num_programs(2) - 1)
    def _finalize():
        o_ref[...] = (acc_ref[...] + b_ref[...]).astype(o_ref.dtype)


def _linear_out_kernel(x_ref, w_ref, b_ref, o_ref, *, compute_dtype):
    # f32 output: accumulate directly into the resident output block.
    k = pl.program_id(2)

    @pl.when(k == 0)
    def _init():
        o_ref[...] = jnp.broadcast_to(b_ref[...], o_ref.shape)

    o_ref[...] += jnp.dot(
        x_ref[...].astype(compute_dtype),
        w_ref[...].astype(compute_dtype),
        preferred_element_type=jnp.float32,
    )


def linear(x, w_t, b, *, out_dtype=jnp.bfloat16, compute_dtype=jnp.bfloat16,
           tm=256, tn=256, tk=512, vmem_limit_bytes=None):
    """Tiled y = x @ w_t + b with pre-transposed w_t (Din, Dout)."""
    M, Din = x.shape
    Din2, Dout = w_t.shape
    assert Din == Din2
    tm = _pick_tile(M, tm, 8)
    tn = _pick_tile(Dout, tn, 128)
    tk = _pick_reduce_tile(Din, tk, 128)
    grid = (pl.cdiv(M, tm), pl.cdiv(Dout, tn), pl.cdiv(Din, tk))

    if _is_f32(out_dtype):
        kernel = functools.partial(_linear_out_kernel, compute_dtype=compute_dtype)
        scratch = []
    else:
        kernel = functools.partial(_linear_acc_kernel, compute_dtype=compute_dtype)
        scratch = [pltpu.VMEM((tm, tn), jnp.float32)]

    return pl.pallas_call(
        kernel,
        grid=grid,
        out_shape=jax.ShapeDtypeStruct((M, Dout), out_dtype),
        in_specs=[
            pl.BlockSpec((tm, tk), lambda i, j, k: (i, k)),   # x
            pl.BlockSpec((tk, tn), lambda i, j, k: (k, j)),   # w_t (Din, Dout)
            pl.BlockSpec((1, tn), lambda i, j, k: (0, j)),    # bias
        ],
        out_specs=pl.BlockSpec((tm, tn), lambda i, j, k: (i, j)),
        scratch_shapes=scratch,
        compiler_params=pltpu.CompilerParams(
            dimension_semantics=("parallel", "parallel", "arbitrary"),
            vmem_limit_bytes=vmem_limit_bytes,
        ),
    )(x, w_t, b.reshape(1, Dout))


# -----------------------------------------------------------------------------
# Kernel 2: tiled multi-head attention.
#   Per grid step (b, q_tile): q block (tq, D), full k/v (Sk, D) blocks,
#   merged-head output block (tq, D), attn-weights block (H, tq, Sk).
#   Heads are static column slices taken in-kernel.
# -----------------------------------------------------------------------------
def _mha_attn_kernel(q_ref, k_ref, v_ref, o_ref, attn_ref, *,
                     num_heads, scale, compute_dtype, approx_recip):
    d_k = q_ref.shape[-1] // num_heads
    q = q_ref[...]
    k = k_ref[...]
    v = v_ref[...]

    for h in range(num_heads):                       # static unroll over heads
        lo = h * d_k
        # Fold 1/sqrt(d_k) into q (O(tq*d_k) work instead of O(tq*Sk)).
        qh = (q[:, lo:lo + d_k].astype(jnp.float32) * scale).astype(compute_dtype)
        kh = k[:, lo:lo + d_k].astype(compute_dtype)
        vh = v[:, lo:lo + d_k].astype(compute_dtype)

        # scores = qh @ kh^T (contract last dims; no materialized transpose).
        s = lax.dot_general(
            qh, kh, (((1,), (1,)), ((), ())), preferred_element_type=jnp.float32
        )                                            # (tq, Sk) f32
        # Softmax statistics stay f32 (v5e has no bf16 VPU/EUP path).
        s = s - jnp.max(s, axis=-1, keepdims=True)
        e = jnp.exp(s)
        p = e * pl.reciprocal(jnp.sum(e, axis=-1, keepdims=True), approx=approx_recip)

        attn_ref[h] = p.astype(attn_ref.dtype)
        # Store this head's PV result directly into its column slice.
        o_ref[:, lo:lo + d_k] = jnp.dot(
            p.astype(compute_dtype), vh, preferred_element_type=jnp.float32
        ).astype(o_ref.dtype)


def _attention_pallas_call(arrays, in_specs, B, Sq, Sk, D, num_heads, tq,
                           compute_dtype, attn_dtype):
    d_k = D // num_heads
    scale = 1.0 / math.sqrt(d_k)
    kernel = functools.partial(
        _mha_attn_kernel, num_heads=num_heads, scale=scale,
        compute_dtype=compute_dtype, approx_recip=not _is_f32(compute_dtype),
    )
    nq = Sq // tq
    o_spec = pl.BlockSpec((pl.Squeezed(), tq, D), lambda b, qi: (b, qi, 0))
    attn_spec = pl.BlockSpec(
        (pl.Squeezed(), num_heads, tq, Sk), lambda b, qi: (b, 0, qi, 0)
    )
    return pl.pallas_call(
        kernel,
        grid=(B, nq),
        out_shape=(
            jax.ShapeDtypeStruct((B, Sq, D), compute_dtype),
            jax.ShapeDtypeStruct((B, num_heads, Sq, Sk), attn_dtype),
        ),
        in_specs=in_specs,
        out_specs=(o_spec, attn_spec),
        compiler_params=pltpu.CompilerParams(
            dimension_semantics=("parallel", "parallel")
        ),
    )(*arrays)


def attention(q, k, v, num_heads, *, compute_dtype=jnp.bfloat16,
              attn_dtype=jnp.float32, tq_cap=128):
    """q: (B, Sq, D), k/v: (B, Sk, D) -> (out (B, Sq, D), attn (B, H, Sq, Sk))."""
    B, Sq, D = q.shape
    Sk = k.shape[1]
    tq = _choose_tq(Sq, tq_cap)
    q_spec = pl.BlockSpec((pl.Squeezed(), tq, D), lambda b, qi: (b, qi, 0))
    kv_spec = pl.BlockSpec((pl.Squeezed(), Sk, D), lambda b, qi: (b, 0, 0))
    return _attention_pallas_call(
        (q, k, v), [q_spec, kv_spec, kv_spec],
        B, Sq, Sk, D, num_heads, tq, compute_dtype, attn_dtype)


def attention_from_qkv_slab(qkv, B, Sq, num_heads, *, compute_dtype=jnp.bfloat16,
                            attn_dtype=jnp.float32, tq_cap=128):
    """qkv: fused (B*Sq, 3D) projection slab; q/k/v are column blocks selected
    by the BlockSpec index maps (no wrapper slices). Requires D % 128 == 0 and
    (Sq % 8 == 0 or B == 1)."""
    M, threeD = qkv.shape
    D = threeD // 3
    assert M == B * Sq and threeD == 3 * D
    tq = _choose_tq(Sq, tq_cap)
    nq = Sq // tq
    q_spec = pl.BlockSpec((tq, D), lambda b, qi: (b * nq + qi, 0))
    k_spec = pl.BlockSpec((Sq, D), lambda b, qi: (b, 1))
    v_spec = pl.BlockSpec((Sq, D), lambda b, qi: (b, 2))
    return _attention_pallas_call(
        (qkv, qkv, qkv), [q_spec, k_spec, v_spec],
        B, Sq, Sq, D, num_heads, tq, compute_dtype, attn_dtype)


# -----------------------------------------------------------------------------
# Parameter handling + full module forward
# -----------------------------------------------------------------------------
def init_params(key, d_model):
    """Torch-style separate Q/K/V/O linears (w: (Dout, Din), b: (Dout,))."""
    ks = jax.random.split(key, 8)
    scale = 1.0 / math.sqrt(d_model)

    def lin(kw, kb):
        w = jax.random.uniform(kw, (d_model, d_model), jnp.float32, -scale, scale)
        b = jax.random.uniform(kb, (d_model,), jnp.float32, -scale, scale)
        return w, b

    wq, bq = lin(ks[0], ks[1])
    wk, bk = lin(ks[2], ks[3])
    wv, bv = lin(ks[4], ks[5])
    wo, bo = lin(ks[6], ks[7])
    return dict(wq=wq, bq=bq, wk=wk, bk=bk, wv=wv, bv=bv, wo=wo, bo=bo)


def prepare_params(params, compute_dtype=jnp.bfloat16):
    """One-time prep (outside the per-step forward):
    - pre-transpose every weight to (Din, Dout) so the matmul kernel is a plain
      (1,)x(0,) contraction (no in-kernel RHS relayout),
    - fuse Q/K/V into a single (Din, 3D) weight for one wide projection,
    - store matmul weights in compute_dtype (halves HBM weight traffic for bf16).
    Biases stay f32 (added into the f32 accumulator)."""
    cast = lambda w: w.astype(compute_dtype)
    wq_t, wk_t, wv_t, wo_t = (params["wq"].T, params["wk"].T,
                              params["wv"].T, params["wo"].T)
    return dict(
        wqkv_t=cast(jnp.concatenate([wq_t, wk_t, wv_t], axis=1)),   # (D, 3D)
        bqkv=jnp.concatenate([params["bq"], params["bk"], params["bv"]]),
        wq_t=cast(wq_t), bq=params["bq"],
        wk_t=cast(wk_t), bk=params["bk"],
        wv_t=cast(wv_t), bv=params["bv"],
        wo_t=cast(wo_t), bo=params["bo"],
    )


def multi_head_attention(fparams, query, key, value, num_heads, mask=None, *,
                         compute_dtype=jnp.bfloat16, attn_dtype=None,
                         out_dtype=jnp.float32):
    """Forward pass of the PyTorch MultiHeadAttention (eval-mode dropout).

    `fparams` comes from prepare_params(). Returns (out (B,Sq,D), attn (B,H,Sq,Sk)).
    Intermediates and the attn-weights output use compute_dtype (bf16 default).
    """
    # TODO(synk): optional mask path (scores.masked_fill(mask==0, -1e9)) not implemented.
    assert mask is None
    if attn_dtype is None:
        attn_dtype = jnp.float32 if _is_f32(compute_dtype) else jnp.bfloat16

    B, Sq, D = query.shape
    Sk = key.shape[1]

    # NOTE: object-identity check is fragile under jit/tracing wrappers; it only
    # falls back to the (slower, still correct) 3-matmul path.
    self_attn = (key is query) and (value is query)
    if self_attn:
        # Single fused QKV projection (one launch, wide N keeps the MXU full),
        # emitted in compute_dtype (bf16) to halve activation HBM traffic.
        qkv = linear(query.reshape(B * Sq, D), fparams["wqkv_t"], fparams["bqkv"],
                     out_dtype=compute_dtype, compute_dtype=compute_dtype)
        if D % 128 == 0 and (Sq % 8 == 0 or B == 1):
            out3, attn = attention_from_qkv_slab(
                qkv, B, Sq, num_heads,
                compute_dtype=compute_dtype, attn_dtype=attn_dtype)
        else:
            # TODO(synk): these wrapper slices cost one extra HBM round-trip of
            #             the slab; only taken when D is not a multiple of 128.
            q3 = qkv[:, :D].reshape(B, Sq, D)
            k3 = qkv[:, D:2 * D].reshape(B, Sq, D)
            v3 = qkv[:, 2 * D:].reshape(B, Sq, D)
            out3, attn = attention(q3, k3, v3, num_heads,
                                   compute_dtype=compute_dtype,
                                   attn_dtype=attn_dtype)
    else:
        q3 = linear(query.reshape(B * Sq, D), fparams["wq_t"], fparams["bq"],
                    out_dtype=compute_dtype, compute_dtype=compute_dtype
                    ).reshape(B, Sq, D)
        k3 = linear(key.reshape(B * Sk, D), fparams["wk_t"], fparams["bk"],
                    out_dtype=compute_dtype, compute_dtype=compute_dtype
                    ).reshape(B, Sk, D)
        v3 = linear(value.reshape(B * Sk, D), fparams["wv_t"], fparams["bv"],
                    out_dtype=compute_dtype, compute_dtype=compute_dtype
                    ).reshape(B, Sk, D)
        out3, attn = attention(q3, k3, v3, num_heads,
                               compute_dtype=compute_dtype, attn_dtype=attn_dtype)

    out = linear(out3.reshape(B * Sq, D), fparams["wo_t"], fparams["bo"],
                 out_dtype=out_dtype, compute_dtype=compute_dtype
                 ).reshape(B, Sq, D)
    return out, attn


# -----------------------------------------------------------------------------
# Pure-JAX reference (mirrors the PyTorch forward, eval-mode dropout)
# -----------------------------------------------------------------------------
def reference(params, query, key, value, num_heads):
    B, Sq, D = query.shape
    Sk = key.shape[1]
    d_k = D // num_heads

    def lin(x, w, b):
        return x @ w.T + b

    q = lin(query, params["wq"], params["bq"]).reshape(B, Sq, num_heads, d_k).transpose(0, 2, 1, 3)
    k = lin(key, params["wk"], params["bk"]).reshape(B, Sk, num_heads, d_k).transpose(0, 2, 1, 3)
    v = lin(value, params["wv"], params["bv"]).reshape(B, Sk, num_heads, d_k).transpose(0, 2, 1, 3)
    scores = jnp.einsum("bhqd,bhkd->bhqk", q, k) / math.sqrt(d_k)
    attn = jax.nn.softmax(scores, axis=-1)
    out = jnp.einsum("bhqk,bhkd->bhqd", attn, v)
    out = out.transpose(0, 2, 1, 3).reshape(B, Sq, D)
    out = lin(out, params["wo"], params["bo"])
    return out, attn


if __name__ == "__main__":
    # D=128 keeps shapes small but lane-aligned, so the fused QKV-slab direct
    # feed (and 128-wide blocks everywhere) is exercised.
    B, S, D, H = 2, 8, 128, 4
    root = jax.random.PRNGKey(0)
    kp, kq, kk, kv = jax.random.split(root, 4)
    params = init_params(kp, D)
    query = jax.random.normal(kq, (B, S, D), jnp.float32)
    key = jax.random.normal(kk, (B, S, D), jnp.float32)
    value = jax.random.normal(kv, (B, S, D), jnp.float32)

    # 1) Cross-attention path (distinct q/k/v), f32 compute: tight check
    #    (exact reciprocal, f32 activations, direct-into-o_ref accumulation).
    fparams32 = prepare_params(params, compute_dtype=jnp.float32)
    out, attn = multi_head_attention(fparams32, query, key, value, H,
                                     compute_dtype=jnp.float32)
    out, attn = jax.block_until_ready((out, attn))
    out_ref, attn_ref = reference(params, query, key, value, H)
    assert out.shape == (B, S, D) and attn.shape == (B, H, S, S)
    assert jnp.allclose(out, out_ref, atol=1e-4, rtol=1e-4)
    assert jnp.allclose(attn, attn_ref, atol=1e-5, rtol=1e-5)

    # 2) Self-attention fast path: fused QKV slab fed directly to attention,
    #    bf16 matmuls / activations / attn-weights, f32 accumulation.
    fparams16 = prepare_params(params, compute_dtype=jnp.bfloat16)
    out_sa, attn_sa = multi_head_attention(fparams16, query, query, query, H,
                                           compute_dtype=jnp.bfloat16)
    out_sa, attn_sa = jax.block_until_ready((out_sa, attn_sa))
    out_sa_ref, attn_sa_ref = reference(params, query, query, query, H)
    assert out_sa.shape == (B, S, D) and attn_sa.shape == (B, H, S, S)
    assert jnp.allclose(out_sa, out_sa_ref, atol=5e-2, rtol=5e-2)
    assert jnp.allclose(attn_sa.astype(jnp.float32), attn_sa_ref,
                        atol=2e-2, rtol=2e-2)

    print("KERNEL_OK")
</pallas_src>

<mosaic_0001>
module attributes {stable_mosaic.version = 11 : i64} {
  func.func @_linear_out_kernel(%arg0: i32, %arg1: i32, %arg2: i32, %arg3: memref<16x128xf32, #tpu.memory_space<vmem>>, %arg4: memref<128x128xf32, #tpu.memory_space<vmem>>, %arg5: memref<1x128xf32, #tpu.memory_space<vmem>>, %arg6: memref<16x128xf32, #tpu.memory_space<vmem>>) attributes {dimension_semantics = [#tpu.dimension_semantics<parallel>, #tpu.dimension_semantics<parallel>, #tpu.dimension_semantics<arbitrary>], iteration_bounds = array<i64: 1, 1, 1>, scalar_prefetch = 0 : i64, scratch_operands = 0 : i64, tpu.core_type = #tpu.core_type<tc>, window_params = [{transform_indices = @transform_0, window_bounds = array<i64: 16, 128>}, {transform_indices = @transform_1, window_bounds = array<i64: 128, 128>}, {transform_indices = @transform_2, window_bounds = array<i64: 1, 128>}, {transform_indices = @transform_3, window_bounds = array<i64: 16, 128>}]} {
    %c0_i32 = arith.constant 0 : i32
    %0 = arith.cmpi eq, %arg2, %c0_i32 : i32
    %1 = arith.extui %0 : i1 to i32
    %c0_i32_0 = arith.constant 0 : i32
    %2 = arith.cmpi ne, %1, %c0_i32_0 : i32
    scf.if %2 {
      %c0_8 = arith.constant 0 : index
      %c0_9 = arith.constant 0 : index
      %9 = vector.load %arg5[%c0_8, %c0_9] : memref<1x128xf32, #tpu.memory_space<vmem>>, vector<1x128xf32>
      %10 = vector.shape_cast %9 : vector<1x128xf32> to vector<1x128xf32>
      %11 = vector.broadcast %10 : vector<1x128xf32> to vector<16x128xf32>
      %c0_10 = arith.constant 0 : index
      %c0_11 = arith.constant 0 : index
      %12 = vector.load %arg6[%c0_10, %c0_11] : memref<16x128xf32, #tpu.memory_space<vmem>>, vector<16x128xf32>
      tpu.vector_store %arg6[%c0_10, %c0_11], %11 {strides = array<i32>} : memref<16x128xf32, #tpu.memory_space<vmem>>, vector<16x128xf32>,
    } else {
    }
    %c0 = arith.constant 0 : index
    %c0_1 = arith.constant 0 : index
    %3 = vector.load %arg6[%c0, %c0_1] : memref<16x128xf32, #tpu.memory_space<vmem>>, vector<16x128xf32>
    %c0_2 = arith.constant 0 : index
    %c0_3 = arith.constant 0 : index
    %4 = vector.load %arg3[%c0_2, %c0_3] : memref<16x128xf32, #tpu.memory_space<vmem>>, vector<16x128xf32>
    %c0_4 = arith.constant 0 : index
    %c0_5 = arith.constant 0 : index
    %5 = vector.load %arg4[%c0_4, %c0_5] : memref<128x128xf32, #tpu.memory_space<vmem>>, vector<128x128xf32>
    %cst = arith.constant dense<0.000000e+00> : vector<16x128xf32>
    %6 = tpu.matmul %4, %5, %cst {dimension_numbers = #tpu.dot_dimension_numbers<[1], [0], [0], [1], [0, 0, 1, 1], [], []>} : vector<16x128xf32>, vector<128x128xf32>, vector<16x128xf32> -> vector<16x128xf32>
    %7 = arith.addf %3, %6 : vector<16x128xf32>
    %c0_6 = arith.constant 0 : index
    %c0_7 = arith.constant 0 : index
    %8 = vector.load %arg6[%c0_6, %c0_7] : memref<16x128xf32, #tpu.memory_space<vmem>>, vector<16x128xf32>
    tpu.vector_store %arg6[%c0_6, %c0_7], %7 {strides = array<i32>} : memref<16x128xf32, #tpu.memory_space<vmem>>, vector<16x128xf32>,
    return
  }
  func.func @transform_0(%arg0: i32, %arg1: i32, %arg2: i32) -> (i32, i32) {
    %c0_i32 = arith.constant 0 : i32
    return %arg0, %arg2 : i32, i32
  }
  func.func @transform_1(%arg0: i32, %arg1: i32, %arg2: i32) -> (i32, i32) {
    %c0_i32 = arith.constant 0 : i32
    return %arg2, %arg1 : i32, i32
  }
  func.func @transform_2(%arg0: i32, %arg1: i32, %arg2: i32) -> (i32, i32) {
    %c0_i32 = arith.constant 0 : i32
    %c0_i32_0 = arith.constant 0 : i32
    return %c0_i32, %arg1 : i32, i32
  }
  func.func @transform_3(%arg0: i32, %arg1: i32, %arg2: i32) -> (i32, i32) {
    %c0_i32 = arith.constant 0 : i32
    return %arg0, %arg1 : i32, i32
  }
}

</mosaic_0001>

<llo_original>
// kernel: tpu_custom_call.1
$region0: #{tpu_custom_call.1}
  #allocation0 [shape = 'u32[]', space=smem, size = 0x4, offset = 0x4, fixed_abs, tag = 'smem constant byte address 0x4 - core index']
  #allocation1 [shape = 'u32[144,128]{1,0:T(1,128)}', space=vmem, size = 0x12000, scoped, tag = 'internal scratch']
  %s0 = inlined_call_operand.hbm [shape: f32[16,128], index: 0, kind: input, shape index: {}]
  %s1 = inlined_call_operand.hbm [shape: f32[128,128], index: 1, kind: input, shape index: {}]
  %s2 = inlined_call_operand.vmem [shape: f32[1,128], index: 2, kind: input, shape index: {}]
  %s3 = inlined_call_operand.hbm [shape: f32[16,128], index: 3, kind: output, shape index: {}]
  %s4 = sld [smem:[#allocation0]]
  $region34: #{tpu_custom_call.1} parent=0
    _
  %s6 = ssub.s32 1, %s4
  %s7 = scalar_select 0, %s6, %s4
  $region1: #{tpu_custom_call.1} parent=0
    #allocation2 [shape = 'u8[8192]{0}', space=vmem, size = 0x2000, scoped, tag = 'input window, operand 0, single buffered']
    #allocation3 [shape = 's32[1]{0}', space=sflag, size = 0x4, scoped, tag = 'scoped memory for tpu_custom_call.1']
    #allocation4 [shape = 's32[1]{0}', space=sflag, size = 0x4, scoped, tag = 'scoped memory for tpu_custom_call.1']
    #allocation5 [shape = 'u8[65536]{0}', space=vmem, size = 0x10000, scoped, tag = 'input window, operand 1, single buffered']
    #allocation6 [shape = 's32[1]{0}', space=sflag, size = 0x4, scoped, tag = 'scoped memory for tpu_custom_call.1']
    #allocation7 [shape = 'u8[8192]{0}', space=vmem, size = 0x2000, scoped, tag = 'output window, operand 0, single buffered']
    %8 = vsyncpa [#allocation3], 0
    %9 = vsyncpa [#allocation6], 0
    %10 = vsyncpa [#allocation4], 0
    // Predicated region
    $region2: #{tpu_custom_call.1} parent=1 // pred_check
      _
    $region3: #{tpu_custom_call.1} parent=1 // pred_check_branch
      %12 = sbr.rel (0) target = $region5
    $region4: #{tpu_custom_call.1} parent=1 // pred_region
      %s14 = ssub.s32 256, 256
      %15 = vsyncadd [#allocation3], %s14
      %s16 = sshll.u32 [#allocation2], 4
      %s17 = int_to_ptr.vmem [resolvable:$true] %s16
      %22 = dma.hbm_to_vmem [thread:$0]  %s0, 256, %s17, [#allocation3], 128, 128, 8
    $region5: #{tpu_custom_call.1} parent=1 // pred_fallthru
      _
    // Predicated region
    $region6: #{tpu_custom_call.1} parent=1 // pred_check
      _
    $region7: #{tpu_custom_call.1} parent=1 // pred_check_branch
      %24 = sbr.rel (0) target = $region9
    $region8: #{tpu_custom_call.1} parent=1 // pred_region
      %s26 = ssub.s32 2048, 2048
      %27 = vsyncadd [#allocation6], %s26
      %s28 = sshll.u32 [#allocation5], 4
      %s29 = int_to_ptr.vmem [resolvable:$true] %s28
      %34 = dma.hbm_to_vmem [thread:$0]  %s1, 2048, %s29, [#allocation6], 128, 128, 8
    $region9: #{tpu_custom_call.1} parent=1 // pred_fallthru
      _
    // Predicated region
    $region10: #{tpu_custom_call.1} parent=1 // pred_check
      _
    $region11: #{tpu_custom_call.1} parent=1 // pred_check_branch
      %36 = sbr.rel (0) target = $region13
    $region12: #{tpu_custom_call.1} parent=1 // pred_region
      _
    $region13: #{tpu_custom_call.1} parent=1 // pred_fallthru
      _
    // Predicated region
    $region14: #{tpu_custom_call.1} parent=1 // pred_check
      _
    $region15: #{tpu_custom_call.1} parent=1 // pred_check_branch
      %38 = sbr.rel (0) target = $region17
    $region16: #{tpu_custom_call.1} parent=1 // pred_region
      %39 = dma.done [#allocation3], 256
    $region17: #{tpu_custom_call.1} parent=1 // pred_fallthru
      _
    // Predicated region
    $region18: #{tpu_custom_call.1} parent=1 // pred_check
      _
    $region19: #{tpu_custom_call.1} parent=1 // pred_check_branch
      %41 = sbr.rel (0) target = $region21
    $region20: #{tpu_custom_call.1} parent=1 // pred_region
      %42 = dma.done [#allocation6], 2048
    $region21: #{tpu_custom_call.1} parent=1 // pred_fallthru
      _
    %p43 = scmp.eq.s32.totalorder 0, 0
    // Predicated region
    $region22: #{tpu_custom_call.1} parent=1 // pred_check
      %p44 = pneg %p43
    $region23: #{tpu_custom_call.1} parent=1 // pred_check_branch
      %46 = sbr.rel (%p44) target = $region25
    $region24: #{tpu_custom_call.1} parent=1 // pred_region
      %v47 = vld [vmem:[%s2] sm:$0x1]
      %v49 = vlaneseq
      %v50 = vshrl.u32 %v49, 7
      %v51 = vsub.s32 0, %v50
      %v52 = vrot.slane %v47, %v51
      %54 = vst [vmem:[#allocation7] sm:$0xff] %v52
      %55 = vst [vmem:[#allocation7 + $0x8] sm:$0xff] %v52
    $region25: #{tpu_custom_call.1} parent=1 // pred_fallthru
      _
    %v56 = vld [vmem:[#allocation7] sm:$0xff]
    %v57 = vld [vmem:[#allocation7 + $0x8] sm:$0xff]
    %v58 = vld [vmem:[#allocation2] sm:$0xff]
    %v59 = vld [vmem:[#allocation2 + $0x8] sm:$0xff]
    %v60 = vld [vmem:[#allocation5] sm:$0xff]
    %v61 = vld [vmem:[#allocation5 + $0x8] sm:$0xff]
    %v62 = vld [vmem:[#allocation5 + $0x10] sm:$0xff]
    %v63 = vld [vmem:[#allocation5 + $0x18] sm:$0xff]
    %v64 = vld [vmem:[#allocation5 + $0x20] sm:$0xff]
    %v65 = vld [vmem:[#allocation5 + $0x28] sm:$0xff]
    %v66 = vld [vmem:[#allocation5 + $0x30] sm:$0xff]
    %v67 = vld [vmem:[#allocation5 + $0x38] sm:$0xff]
    %v68 = vld [vmem:[#allocation5 + $0x40] sm:$0xff]
    %v69 = vld [vmem:[#allocation5 + $0x48] sm:$0xff]
    %v70 = vld [vmem:[#allocation5 + $0x50] sm:$0xff]
    %v71 = vld [vmem:[#allocation5 + $0x58] sm:$0xff]
    %v72 = vld [vmem:[#allocation5 + $0x60] sm:$0xff]
    %v73 = vld [vmem:[#allocation5 + $0x68] sm:$0xff]
    %v74 = vld [vmem:[#allocation5 + $0x70] sm:$0xff]
    %v75 = vld [vmem:[#allocation5 + $0x78] sm:$0xff]
    %76 = vmatprep.subr.mxu0 0.0
    %77 = vmatpush1.msra.mxu0 %v60
    %78 = vmatprep.subr.mxu0 0.0
    %79 = vmatpush1.msra.mxu0 %v61
    %80 = vmatprep.subr.mxu0 0.0
    %81 = vmatpush1.msra.mxu0 %v62
    %82 = vmatprep.subr.mxu0 0.0
    %83 = vmatpush1.msra.mxu0 %v63
    %84 = vmatprep.subr.mxu0 0.0
    %85 = vmatpush1.msra.mxu0 %v64
    %86 = vmatprep.subr.mxu0 0.0
    %87 = vmatpush1.msra.mxu0 %v65
    %88 = vmatprep.subr.mxu0 0.0
    %89 = vmatpush1.msra.mxu0 %v66
    %90 = vmatprep.subr.mxu0 0.0
    %91 = vmatpush1.msra.mxu0 %v67
    %92 = vmatprep.subr.mxu0 0.0
    %93 = vmatpush1.msra.mxu0 %v68
    %94 = vmatprep.subr.mxu0 0.0
    %95 = vmatpush1.msra.mxu0 %v69
    %96 = vmatprep.subr.mxu0 0.0
    %97 = vmatpush1.msra.mxu0 %v70
    %98 = vmatprep.subr.mxu0 0.0
    %99 = vmatpush1.msra.mxu0 %v71
    %100 = vmatprep.subr.mxu0 0.0
    %101 = vmatpush1.msra.mxu0 %v72
    %102 = vmatprep.subr.mxu0 0.0
    %103 = vmatpush1.msra.mxu0 %v73
    %104 = vmatprep.subr.mxu0 0.0
    %105 = vmatpush1.msra.mxu0 %v74
    %106 = vmatprep.subr.mxu0 0.0
    %107 = vmatpush1.msra.mxu0 %v75
    %108 = vmatprep.subr.mxu0 0.0
    %109 = vmatpush1.msra.mxu0 0.0
    %110 = vmatprep.subr.mxu0 0.0
    %111 = vmatpush1.msra.mxu0 0.0
    %112 = vmatprep.subr.mxu0 0.0
    %113 = vmatpush1.msra.mxu0 0.0
    %114 = vmatprep.subr.mxu0 0.0
    %115 = vmatpush1.msra.mxu0 0.0
    %116 = vmatprep.subr.mxu0 0.0
    %117 = vmatpush1.msra.mxu0 0.0
    %118 = vmatprep.subr.mxu0 0.0
    %119 = vmatpush1.msra.mxu0 0.0
    %120 = vmatprep.subr.mxu0 0.0
    %121 = vmatpush1.msra.mxu0 0.0
    %122 = vmatprep.subr.mxu0 0.0
    %123 = vmatpush1.msra.mxu0 0.0
    %124 = vmatprep.subr.mxu0 0.0
    %125 = vmatpush1.msra.mxu0 0.0
    %126 = vmatprep.subr.mxu0 0.0
    %127 = vmatpush1.msra.mxu0 0.0
    %128 = vmatprep.subr.mxu0 0.0
    %129 = vmatpush1.msra.mxu0 0.0
    %130 = vmatprep.subr.mxu0 0.0
    %131 = vmatpush1.msra.mxu0 0.0
    %132 = vmatprep.subr.mxu0 0.0
    %133 = vmatpush1.msra.mxu0 0.0
    %134 = vmatprep.subr.mxu0 0.0
    %135 = vmatpush1.msra.mxu0 0.0
    %136 = vmatprep.subr.mxu0 0.0
    %137 = vmatpush1.msra.mxu0 0.0
    %138 = vmatprep.subr.mxu0 0.0
    %139 = vmatpush1.msra.mxu0 0.0
    %140 = vmatprep.mubr.f32.mxu0 0.0
    %141 = vmatmul.mubr.f32.gmra.mrb[0].mxu0 %v58
    %v142 = vpop.f32.mrb[0].mxu0
    %v143 = vadd.f32 0.0, %v142
    %v144 = vpop.f32.mrb[0].mxu0
    %145 = vmatprep.mubr.f32.mxu0 0.0
    %146 = vmatmul.mubr.f32.gmra.mrb[0].mxu0 %v59
    %v147 = vpop.f32.mrb[0].mxu0
    %v148 = vadd.f32 0.0, %v147
    %v149 = vpop.f32.mrb[0].mxu0
    %150 = vdwg.mxu0
    %v151 = vadd.f32 %v56, %v143
    %v152 = vadd.f32 %v57, %v148
    %153 = vst [vmem:[#allocation7] sm:$0xff] %v151
    %154 = vst [vmem:[#allocation7 + $0x8] sm:$0xff] %v152
    // Predicated region
    $region26: #{tpu_custom_call.1} parent=1 // pred_check
      _
    $region27: #{tpu_custom_call.1} parent=1 // pred_check_branch
      %156 = sbr.rel (0) target = $region29
    $region28: #{tpu_custom_call.1} parent=1 // pred_region
      %s158 = ssub.s32 256, 256
      %159 = vsyncadd [#allocation4], %s158
      %s160 = sshll.u32 [#allocation7], 4
      %s161 = int_to_ptr.vmem [resolvable:$true] %s160
      %166 = dma.vmem_to_hbm [thread:$0]  %s161, 256, %s3, [#allocation4], 128, 128, 8
    $region29: #{tpu_custom_call.1} parent=1 // pred_fallthru
      _
    // Predicated region
    $region30: #{tpu_custom_call.1} parent=1 // pred_check
      _
    $region31: #{tpu_custom_call.1} parent=1 // pred_check_branch
      %168 = sbr.rel (0) target = $region33
    $region32: #{tpu_custom_call.1} parent=1 // pred_region
      %169 = dma.done [#allocation4], 256
    $region33: #{tpu_custom_call.1} parent=1 // pred_fallthru
      _
    %170 = vsyncpa [#allocation3], 1
    %171 = vsyncpa [#allocation6], 1
    %172 = vsyncpa [#allocation4], 1

</llo_original>
